<compile_context>
chip_gen: v6e
topology: v6e:2x2x1
jax: 0.10.0
libtpu: 0.0.40
codegen_flags: <defaults>
</compile_context>

<pallas_src>
import functools

import jax
import jax.numpy as jnp
from jax.experimental import pallas as pl
from jax.experimental.pallas import tpu as pltpu


def _embed_kernel(x_ref, w_ref, add_ref, o_ref):
    # x_ref:   (TM, K)  bf16   zero-augmented patch rows (one zero row per
    #                          batch element standing in for the [CLS] slot)
    # w_ref:   (K, H)   bf16   flattened Conv2d weight (resident, 1-buffered)
    # add_ref: (TM, H)  out_dt additive table: cls+pos on CLS rows,
    #                          pos+conv_bias on patch rows (resident, 1-buf)
    # o_ref:   (TM, H)  out_dt
    y = jnp.dot(x_ref[...], w_ref[...], preferred_element_type=jnp.float32)
    o_ref[...] = (y + add_ref[...].astype(jnp.float32)).astype(o_ref.dtype)


def _choose_batch_tile(B, rows_per_batch, target_rows=2048):
    """Pick MB = batch elements per grid step.

    Constraints: MB | B (whole batch elements per tile, so the additive table
    tiles with period R inside each block), TM = MB*R sublane-aligned (%8) and
    <= target_rows so blocks pipeline within VMEM.  Among legal candidates we
    prefer ones giving grid >= 2 (v7x megacore sharding), then the largest TM
    (amortizes the ~0.35us per-step overhead).

    For real ViT shapes (R = 197) this yields MB = 8 -> TM = 1576, grid = B/8.
    Fallback: MB = B (full-extent block, always a legal BlockSpec) — only hit
    for tiny/odd configs such as the toy test below.
    """
    best = None
    for mb in range(1, B + 1):
        if B % mb:
            continue
        tm = mb * rows_per_batch
        if tm % 8 != 0 or tm > target_rows:
            continue
        key = (B // mb >= 2, tm)          # prefer multi-step grids, then big TM
        if best is None or key > best[0]:
            best = (key, mb)
    # TODO(synk): for batch sizes with no aligned divisor (e.g. B=6, R=197) we
    # fall back to one full-extent block; a ragged last tile (cdiv grid) would
    # bound VMEM for that case too.
    return best[1] if best is not None else B


@functools.partial(jax.jit, static_argnames=("compute_dtype", "out_dtype"))
def embeddings_forward(x_nchw, conv_w, conv_b, cls_token, pos_emb,
                       compute_dtype=jnp.bfloat16, out_dtype=jnp.bfloat16):
    """
    x_nchw:    (B, C, IMG, IMG)
    conv_w:    (HID, C, P, P)   (PyTorch Conv2d weight layout)
    conv_b:    (HID,)
    cls_token: (1, 1, HID)
    pos_emb:   (1, N+1, HID)
    returns    (B, N+1, HID)  in `out_dtype` (bf16 by default: the kernel is
               HBM-write-bound at real ViT shapes and downstream LayerNorm is
               typically bf16 anyway; pass out_dtype=jnp.float32 if needed).
    """
    B, C, IMG, _ = x_nchw.shape
    HID, _, P, _ = conv_w.shape
    nP = IMG // P
    N = nP * nP
    K = C * P * P
    R = N + 1                       # rows per batch element in the output

    # --- wrapper glue (single fused XLA pass): patch extraction + zero CLS row
    # Cast to bf16 BEFORE the NCHW->patch transpose: the transpose is a full
    # HBM round trip of the input, doing it in bf16 halves that traffic (the
    # matmul consumes bf16 regardless).
    # (B,C,nP,P,nP,P) -> (B,nP,nP,C,P,P) -> (B,N,K); matches Conv2d(stride=P)
    # followed by flatten(2).transpose(1,2).
    # TODO(synk): fusing the NCHW->patch gather into the kernel (rank-6
    # in-VMEM transpose on the idle XLU) would remove this round trip
    # entirely, but does not lower cleanly today, so it stays in XLA.
    x_c = x_nchw.astype(compute_dtype)
    patches = x_c.reshape(B, C, nP, P, nP, P)
    patches = patches.transpose(0, 2, 4, 1, 3, 5).reshape(B, N, K)
    x_aug = jnp.pad(patches, ((0, 0), (1, 0), (0, 0)))      # zero row -> CLS slot
    x_aug = x_aug.reshape(B * R, K)

    # Flatten conv weight to (K, HID): y[h] = sum_{c,ph,pw} W[h,c,ph,pw]*patch
    w_flat = conv_w.reshape(HID, K).T.astype(compute_dtype)

    # Pre-fold bias / cls / pos into one (R, HID) additive table, stored in the
    # output dtype (bf16 by default) to shrink its resident VMEM footprint.
    pos = pos_emb[0]                                           # (R, HID)
    add_tbl = jnp.concatenate(
        [pos[0:1] + cls_token[0],                              # cls row: cls + pos[0]
         pos[1:] + conv_b[None, :]],                           # patch rows: pos + bias
        axis=0)

    MB = _choose_batch_tile(B, R)
    TM = MB * R
    M = B * R
    add_tile = jnp.tile(add_tbl, (MB, 1)).astype(out_dtype)   # (TM, HID), tiny

    in_isz = jnp.dtype(compute_dtype).itemsize
    out_isz = jnp.dtype(out_dtype).itemsize

    # Explicit VMEM budget: x double-buffered, w/add single-buffered (constant
    # block index -> pl.Buffered(1)), out double-buffered.  Capped at 64 MiB
    # (v7x physical); floor 32 MiB so v5e's 16 MiB default scoped limit never
    # rejects the kernel.
    vmem_est = (2 * TM * K * in_isz          # x blocks
                + 1 * K * HID * in_isz       # resident weight
                + 1 * TM * HID * out_isz     # resident add table
                + 2 * TM * HID * out_isz)    # out blocks
    vmem_limit = int(min(64 << 20, max(32 << 20, int(vmem_est * 1.5))))

    cost = pl.CostEstimate(
        flops=2 * M * K * HID,
        transcendentals=0,
        bytes_accessed=(M * K * in_isz          # x_aug stream
                        + K * HID * in_isz      # weight (once)
                        + TM * HID * out_isz    # add table (once)
                        + M * HID * out_isz),   # output stream
    )

    # NOTE: with the toy HID=32 the output stores are masked (lane width <
    # 128) and the MXU is underfed (K=64); real ViT sizes (HID>=768, K=768)
    # give lane-dense unmasked stores and full MXU feeds — tile choices are
    # validated against those, not the toy shape.
    out_flat = pl.pallas_call(
        _embed_kernel,
        out_shape=jax.ShapeDtypeStruct((M, HID), out_dtype),
        grid_spec=pltpu.PrefetchScalarGridSpec(
            num_scalar_prefetch=0,
            grid=(M // TM,),
            in_specs=[
                pl.BlockSpec((TM, K), lambda i: (i, 0)),
                # Constant-index inputs: single-buffer them to save VMEM.
                pl.BlockSpec((K, HID), lambda i: (0, 0),
                             pipeline_mode=pl.Buffered(1)),
                pl.BlockSpec((TM, HID), lambda i: (0, 0),
                             pipeline_mode=pl.Buffered(1)),
            ],
            out_specs=pl.BlockSpec((TM, HID), lambda i: (i, 0)),
        ),
        compiler_params=pltpu.CompilerParams(
            dimension_semantics=("parallel",),
            vmem_limit_bytes=vmem_limit),
        cost_estimate=cost,
    )(x_aug, w_flat, add_tile)

    # Free reshape: split the leading dim back into (batch, tokens).
    # TODO(synk): nn.Dropout(hidden_dropout_prob) is identity in eval mode; omitted.
    return out_flat.reshape(B, R, HID)


if __name__ == "__main__":
    # config: image_size=16, patch_size=4, num_channels=4, hidden_size=32
    B, C, IMG, P, HID = 2, 4, 16, 4, 32
    nP = IMG // P
    N = nP * nP
    K = C * P * P

    key = jax.random.PRNGKey(0)
    kx, kw, kb, kc, kp = jax.random.split(key, 5)
    x = jax.random.normal(kx, (B, C, IMG, IMG), dtype=jnp.float32)
    conv_w = jax.random.normal(kw, (HID, C, P, P), dtype=jnp.float32) * 0.02
    conv_b = jax.random.normal(kb, (HID,), dtype=jnp.float32) * 0.02
    cls_token = jax.random.normal(kc, (1, 1, HID), dtype=jnp.float32)
    pos_emb = jax.random.normal(kp, (1, N + 1, HID), dtype=jnp.float32)

    out = embeddings_forward(x, conv_w, conv_b, cls_token, pos_emb)
    out = jax.block_until_ready(out)
    assert out.shape == (B, N + 1, HID), out.shape

    # pure-JAX f32 reference (Conv2d-as-matmul + cls token + position embeds)
    patches = x.reshape(B, C, nP, P, nP, P).transpose(0, 2, 4, 1, 3, 5).reshape(B, N, K)
    ref_patch = patches @ conv_w.reshape(HID, K).T + conv_b[None, None, :]
    ref = jnp.concatenate(
        [jnp.broadcast_to(cls_token, (B, 1, HID)), ref_patch], axis=1) + pos_emb

    # bf16 matmul inputs + bf16 output (f32 accumulation) => loosened tolerance
    out_f32 = out.astype(jnp.float32)
    max_err = float(jnp.max(jnp.abs(out_f32 - ref)))
    assert jnp.allclose(out_f32, ref, atol=3e-2, rtol=3e-2), max_err

    # also sanity-check the tiling heuristic at real ViT shapes
    assert _choose_batch_tile(256, 197) == 8     # TM=1576, grid=32
    assert _choose_batch_tile(2, 17) == 2        # toy fallback: full extent

    print("KERNEL_OK")
</pallas_src>

<mosaic_0001>
module attributes {stable_mosaic.version = 11 : i64} {
  func.func @_embed_kernel(%arg0: i32, %arg1: memref<34x64xbf16, #tpu.memory_space<vmem>>, %arg2: memref<64x32xbf16, #tpu.memory_space<vmem>>, %arg3: memref<34x32xbf16, #tpu.memory_space<vmem>>, %arg4: memref<34x32xbf16, #tpu.memory_space<vmem>>) attributes {dimension_semantics = [#tpu.dimension_semantics<parallel>], iteration_bounds = array<i64: 1>, scalar_prefetch = 0 : i64, scratch_operands = 0 : i64, tpu.core_type = #tpu.core_type<tc>, window_params = [{transform_indices = @transform_0, window_bounds = array<i64: 34, 64>}, {pipeline_mode = #tpu.pipeline_mode<synchronous>, transform_indices = @transform_1, window_bounds = array<i64: 64, 32>}, {pipeline_mode = #tpu.pipeline_mode<synchronous>, transform_indices = @transform_2, window_bounds = array<i64: 34, 32>}, {transform_indices = @transform_3, window_bounds = array<i64: 34, 32>}]} {
    %c0 = arith.constant 0 : index
    %c0_0 = arith.constant 0 : index
    %0 = vector.load %arg1[%c0, %c0_0] : memref<34x64xbf16, #tpu.memory_space<vmem>>, vector<34x64xbf16>
    %c0_1 = arith.constant 0 : index
    %c0_2 = arith.constant 0 : index
    %1 = vector.load %arg2[%c0_1, %c0_2] : memref<64x32xbf16, #tpu.memory_space<vmem>>, vector<64x32xbf16>
    %cst = arith.constant dense<0.000000e+00> : vector<34x32xf32>
    %2 = tpu.matmul %0, %1, %cst {dimension_numbers = #tpu.dot_dimension_numbers<[1], [0], [0], [1], [0, 0, 1, 1], [], []>} : vector<34x64xbf16>, vector<64x32xbf16>, vector<34x32xf32> -> vector<34x32xf32>
    %c0_3 = arith.constant 0 : index
    %c0_4 = arith.constant 0 : index
    %3 = vector.load %arg3[%c0_3, %c0_4] : memref<34x32xbf16, #tpu.memory_space<vmem>>, vector<34x32xbf16>
    %4 = arith.extf %3 : vector<34x32xbf16> to vector<34x32xf32>
    %5 = arith.addf %2, %4 : vector<34x32xf32>
    %6 = arith.truncf %5 : vector<34x32xf32> to vector<34x32xbf16>
    %c0_5 = arith.constant 0 : index
    %c0_6 = arith.constant 0 : index
    %7 = vector.load %arg4[%c0_5, %c0_6] : memref<34x32xbf16, #tpu.memory_space<vmem>>, vector<34x32xbf16>
    tpu.vector_store %arg4[%c0_5, %c0_6], %6 {strides = array<i32>} : memref<34x32xbf16, #tpu.memory_space<vmem>>, vector<34x32xbf16>,
    return
  }
  func.func @transform_0(%arg0: i32) -> (i32, i32) {
    %c0_i32 = arith.constant 0 : i32
    %c0_i32_0 = arith.constant 0 : i32
    return %arg0, %c0_i32 : i32, i32
  }
  func.func @transform_1(%arg0: i32) -> (i32, i32) {
    %c0_i32 = arith.constant 0 : i32
    %c0_i32_0 = arith.constant 0 : i32
    %c0_i32_1 = arith.constant 0 : i32
    return %c0_i32, %c0_i32_0 : i32, i32
  }
  func.func @transform_2(%arg0: i32) -> (i32, i32) {
    %c0_i32 = arith.constant 0 : i32
    %c0_i32_0 = arith.constant 0 : i32
    %c0_i32_1 = arith.constant 0 : i32
    return %c0_i32, %c0_i32_0 : i32, i32
  }
  func.func @transform_3(%arg0: i32) -> (i32, i32) {
    %c0_i32 = arith.constant 0 : i32
    %c0_i32_0 = arith.constant 0 : i32
    return %arg0, %c0_i32 : i32, i32
  }
}

</mosaic_0001>

<llo_original>
// kernel: embeddings_forward.1
$region0: #{embeddings_forward.1}
  #allocation0 [shape = 'u32[]', space=smem, size = 0x4, offset = 0x4, fixed_abs, tag = 'smem constant byte address 0x4 - core index']
  #allocation1 [shape = 'u32[144,128]{1,0:T(1,128)}', space=vmem, size = 0x12000, scoped, tag = 'internal scratch']
  %s0 = inlined_call_operand.vmem [shape: bf16[34,64], index: 0, kind: input, shape index: {}]
  %s1 = inlined_call_operand.vmem [shape: bf16[64,32], index: 1, kind: input, shape index: {}]
  %s2 = inlined_call_operand.vmem [shape: bf16[34,32], index: 2, kind: input, shape index: {}]
  %s3 = inlined_call_operand.vmem [shape: bf16[34,32], index: 3, kind: output, shape index: {}]
  %s4 = sld [smem:[#allocation0]]
  $region22: #{embeddings_forward.1} parent=0
    _
  %s6 = ssub.s32 1, %s4
  %s7 = scalar_select 0, %s6, %s4
  // Predicated region
  $region2: #{embeddings_forward.1} parent=0 // pred_check
    _
  $region3: #{embeddings_forward.1} parent=0 // pred_check_branch
    %9 = sbr.rel (0) target = $region5
  $region4: #{embeddings_forward.1} parent=0 // pred_region
    _
  $region5: #{embeddings_forward.1} parent=0 // pred_fallthru
    _
  // Predicated region
  $region6: #{embeddings_forward.1} parent=0 // pred_check
    _
  $region7: #{embeddings_forward.1} parent=0 // pred_check_branch
    %11 = sbr.rel (0) target = $region9
  $region8: #{embeddings_forward.1} parent=0 // pred_region
    _
  $region9: #{embeddings_forward.1} parent=0 // pred_fallthru
    _
  // Predicated region
  $region10: #{embeddings_forward.1} parent=0 // pred_check
    _
  $region11: #{embeddings_forward.1} parent=0 // pred_check_branch
    %13 = sbr.rel (0) target = $region13
  $region12: #{embeddings_forward.1} parent=0 // pred_region
    _
  $region13: #{embeddings_forward.1} parent=0 // pred_fallthru
    _
  %v15 = vld [vmem:[%s0] sm:$0xf]
  %v16 = vld [vmem:[%s0 + $0x4] sm:$0xf]
  %v17 = vld [vmem:[%s0 + $0x8] sm:$0xf]
  %v18 = vld [vmem:[%s0 + $0xc] sm:$0xf]
  %v19 = vld [vmem:[%s0 + $0x10] sm:$0x1]
  %v20 = vld [vmem:[%s1] sm:$0xf]
  %v21 = vld [vmem:[%s1 + $0x4] sm:$0xf]
  %v22 = vld [vmem:[%s1 + $0x8] sm:$0xf]
  %v23 = vld [vmem:[%s1 + $0xc] sm:$0xf]
  %v24 = vld [vmem:[%s1 + $0x10] sm:$0xf]
  %v25 = vld [vmem:[%s1 + $0x14] sm:$0xf]
  %v26 = vld [vmem:[%s1 + $0x18] sm:$0xf]
  %v27 = vld [vmem:[%s1 + $0x1c] sm:$0xf]
  %v28 = vld [vmem:[%s2] sm:$0xf]
  %v29 = vld [vmem:[%s2 + $0x4] sm:$0xf]
  %v30 = vld [vmem:[%s2 + $0x8] sm:$0xf]
  %v31 = vld [vmem:[%s2 + $0xc] sm:$0xf]
  %v32 = vld [vmem:[%s2 + $0x10] sm:$0x1]
  %v33 = vunpack.c.l.bf16 %v28
  %v34 = vunpack.c.l.bf16 %v29
  %v35 = vunpack.c.l.bf16 %v30
  %v36 = vunpack.c.l.bf16 %v31
  %v37 = vunpack.c.l.bf16 %v32
  %v43 = vunpack.c.l.b16 %v15
  %v44 = vunpack.c.l.b16 %v16
  %v45 = vunpack.c.l.b16 %v17
  %v46 = vunpack.c.l.b16 %v18
  %v47 = vunpack.c.l.b16 %v19
  %v48 = vpack.c.b16 %v44, %v43
  %v49 = vpack.c.b16 %v46, %v45
  %v50 = vpack.c.b16 %v47, %v47
  %v59 = vunpack.c.l.b16 %v20
  %v60 = vunpack.c.l.b16 %v21
  %v61 = vunpack.c.l.b16 %v22
  %v62 = vunpack.c.l.b16 %v23
  %v63 = vunpack.c.l.b16 %v24
  %v64 = vunpack.c.l.b16 %v25
  %v65 = vunpack.c.l.b16 %v26
  %v66 = vunpack.c.l.b16 %v27
  %v67 = vpack.c.b16 %v60, %v59
  %v68 = vpack.c.b16 %v62, %v61
  %v69 = vpack.c.b16 %v64, %v63
  %v70 = vpack.c.b16 %v66, %v65
  %vm75 = vcmask 523264
  %v77 = vsel %vm75, %v48, 0
  %v80 = vsel %vm75, %v49, 0
  %v83 = vsel %vm75, %v50, 0
  %85 = vmatprep.subr.bf16.mxu0 0
  %86 = vmatpush1.bf16.msra.mxu0 0
  %87 = vmatprep.subr.bf16.mxu0 0
  %88 = vmatpush1.bf16.msra.mxu0 0
  %89 = vmatprep.subr.bf16.mxu0 0
  %90 = vmatpush1.bf16.msra.mxu0 0
  %91 = vmatprep.subr.bf16.mxu0 0
  %92 = vmatpush1.bf16.msra.mxu0 0
  %93 = vmatprep.subr.bf16.mxu0 0
  %94 = vmatpush1.bf16.msra.mxu0 %v70
  %95 = vmatprep.subr.bf16.mxu0 0
  %96 = vmatpush1.bf16.msra.mxu0 %v69
  %97 = vmatprep.subr.bf16.mxu0 0
  %98 = vmatpush1.bf16.msra.mxu0 %v68
  %99 = vmatprep.subr.bf16.mxu0 0
  %100 = vmatpush1.bf16.msra.mxu0 %v67
  %101 = vmatprep.subr.bf16.mxu0 0
  %102 = vmatpush2.bf16.msra.mxu0 0
  %103 = vmatprep.subr.bf16.mxu0 0
  %104 = vmatpush2.bf16.msra.mxu0 0
  %105 = vmatprep.subr.bf16.mxu0 0
  %106 = vmatpush2.bf16.msra.mxu0 0
  %107 = vmatprep.subr.bf16.mxu0 0
  %108 = vmatpush2.bf16.msra.mxu0 0
  %109 = vmatprep.subr.bf16.mxu0 0
  %110 = vmatpush2.bf16.msra.mxu0 0
  %111 = vmatprep.subr.bf16.mxu0 0
  %112 = vmatpush2.bf16.msra.mxu0 0
  %113 = vmatprep.subr.bf16.mxu0 0
  %114 = vmatpush2.bf16.msra.mxu0 0
  %115 = vmatprep.subr.bf16.mxu0 0
  %116 = vmatpush2.bf16.msra.mxu0 0
  %117 = vmatprep.mubr.bf16.mxu0 0
  %118 = vmatmul.mubr.bf16.gmra.mxu0 %v77
  %v119 = vpop.f32.mrf.mxu0
  %v120 = vadd.f32 %v33, %v119
  %v121 = vpop.f32.mrf.mxu0
  %v122 = vpop.f32.mrf.mxu0
  %v123 = vadd.f32 %v34, %v122
  %v124 = vpop.f32.mrf.mxu0
  %125 = vmatprep.mubr.bf16.mxu0 0
  %126 = vmatmul.mubr.bf16.gmra.mxu0 %v80
  %v127 = vpop.f32.mrf.mxu0
  %v128 = vadd.f32 %v35, %v127
  %v129 = vpop.f32.mrf.mxu0
  %v130 = vpop.f32.mrf.mxu0
  %v131 = vadd.f32 %v36, %v130
  %v132 = vpop.f32.mrf.mxu0
  %133 = vmatprep.mubr.bf16.mxu0 0
  %134 = vmatmul.mubr.bf16.gmra.mxu0 %v83
  %v135 = vpop.f32.mrf.mxu0
  %v136 = vadd.f32 %v37, %v135
  %v137 = vpop.f32.mrf.mxu0
  %v138 = vpop.f32.mrf.mxu0
  %v139 = vpop.f32.mrf.mxu0
  %140 = vdwg.mxu0
  %v141 = vpack.c.bf16 %v123, %v120
  %v142 = vpack.c.bf16 %v131, %v128
  %v143 = vpack.c.bf16 %v136, %v136
  %v147 = vunpack.c.l.b16 %v141
  %v148 = vunpack.c.h.b16 %v141
  %v149 = vunpack.c.l.b16 %v142
  %v150 = vunpack.c.h.b16 %v142
  %v151 = vunpack.c.l.b16 %v143
  %v152 = vpack.c.b16 %v147, %v147
  %v153 = vpack.c.b16 %v148, %v148
  %v154 = vpack.c.b16 %v149, %v149
  %v155 = vpack.c.b16 %v150, %v150
  %v156 = vpack.c.b16 %v151, %v151
  %vm162 = vcmask 257024
  %163 = vst.msk [vmem:[%s3] sm:$0xf] %vm162, %v152
  %164 = vst.msk [vmem:[%s3 + $0x4] sm:$0xf] %vm162, %v153
  %165 = vst.msk [vmem:[%s3 + $0x8] sm:$0xf] %vm162, %v154
  %166 = vst.msk [vmem:[%s3 + $0xc] sm:$0xf] %vm162, %v155
  %vm167 = vcmask 253952
  %168 = vst.msk [vmem:[%s3 + $0x10] sm:$0x1] %vm167, %v156
  // Predicated region
  $region14: #{embeddings_forward.1} parent=0 // pred_check
    _
  $region15: #{embeddings_forward.1} parent=0 // pred_check_branch
    %170 = sbr.rel (0) target = $region17
  $region16: #{embeddings_forward.1} parent=0 // pred_region
    _
  $region17: #{embeddings_forward.1} parent=0 // pred_fallthru
    _
  // Predicated region
  $region18: #{embeddings_forward.1} parent=0 // pred_check
    _
  $region19: #{embeddings_forward.1} parent=0 // pred_check_branch
    %172 = sbr.rel (0) target = $region21
  $region20: #{embeddings_forward.1} parent=0 // pred_region
    _
  $region21: #{embeddings_forward.1} parent=0 // pred_fallthru
    _

</llo_original>
